<compile_context>
chip_gen: v6e
topology: v6e:2x2x1
jax: 0.10.0
libtpu: 0.0.40
codegen_flags: <defaults>
</compile_context>

<pallas_src>
import math

import jax
import jax.numpy as jnp
from jax.experimental import pallas as pl
from jax.experimental.pallas import tpu as pltpu

_LANE = 128       # TPU lane width
_MAX_TB = 2048    # max batch-tile (lane) width per grid step


def _round_up(n, m):
    return ((n + m - 1) // m) * m


def _fused_linear_kernel(w_ref, b_ref, x_ref, o_ref):
    # y^T tile = W_fused @ x^T tile + b_fused   (MXU matmul, f32 accumulate)
    y = jnp.dot(w_ref[...], x_ref[...], preferred_element_type=jnp.float32)
    o_ref[...] = (y + b_ref[...]).astype(o_ref.dtype)


def fuse_params(w1, b1, w2, b2):
    """Fuse the two PyTorch-layout Linear layers (done once, not per call).

    Returns (w_fused, b_fused_col) where
      w_fused     = W2 @ W1            (F_out, F_in) -- acts on x^T
      b_fused_col = (W2 @ b1 + b2)[:, None]          (F_out, 1)
    """
    w1 = jnp.asarray(w1, jnp.float32)
    w2 = jnp.asarray(w2, jnp.float32)
    b1 = jnp.asarray(b1, jnp.float32)
    b2 = jnp.asarray(b2, jnp.float32)
    w_fused = w2 @ w1
    b_fused_col = (w2 @ b1 + b2)[:, None]
    return w_fused, b_fused_col


@jax.jit
def model_forward_fused(x, w_fused, b_fused_col):
    """Forward pass on pre-fused parameters.  x: (B, 16) float32."""
    B, f_in = x.shape
    f_out = w_fused.shape[0]

    # Batch tile on the lane axis: multiple of 128, capped at _MAX_TB.
    tb = min(_MAX_TB, _round_up(B, _LANE))
    bp = _round_up(B, tb)

    # Transposed, lane-padded input: (F_in, Bp).  Padding columns are zero;
    # they only produce bias-valued garbage that is sliced away below.
    x_t = jnp.zeros((f_in, bp), x.dtype).at[:, :B].set(x.T)

    y_t = pl.pallas_call(
        _fused_linear_kernel,
        out_shape=jax.ShapeDtypeStruct((f_out, bp), x.dtype),
        grid=(bp // tb,),
        in_specs=[
            pl.BlockSpec((f_out, f_in), lambda i: (0, 0)),  # fused weight (resident)
            pl.BlockSpec((f_out, 1), lambda i: (0, 0)),     # fused bias column
            pl.BlockSpec((f_in, tb), lambda i: (0, i)),     # x^T batch tile
        ],
        out_specs=pl.BlockSpec((f_out, tb), lambda i: (0, i)),  # lane-dense store
        compiler_params=pltpu.CompilerParams(
            dimension_semantics=("parallel",),  # megacore-shard batch on v7x
        ),
    )(w_fused, b_fused_col, x_t)

    return y_t[:, :B].T


def model_forward(x, w1, b1, w2, b2):
    """Full forward matching PyTorch Model.forward (convenience wrapper)."""
    w_fused, b_fused_col = fuse_params(w1, b1, w2, b2)
    return model_forward_fused(x, w_fused, b_fused_col)


def _init_linear_params(key, out_features, in_features):
    """Deterministic init mimicking torch.nn.Linear defaults."""
    k_w, k_b = jax.random.split(key)
    bound = 1.0 / math.sqrt(in_features)
    w = jax.random.uniform(
        k_w, (out_features, in_features), jnp.float32, minval=-bound, maxval=bound
    )
    b = jax.random.uniform(
        k_b, (out_features,), jnp.float32, minval=-bound, maxval=bound
    )
    return w, b


if __name__ == "__main__":
    key = jax.random.PRNGKey(0)
    k_x, k_l1, k_l2 = jax.random.split(key, 3)

    B, F = 8, 16
    x = jax.random.normal(k_x, (B, F), jnp.float32)

    # seq[0] = Linear(16,16), linear = Linear(16,16)  (PyTorch layout: (out,in))
    w1, b1 = _init_linear_params(k_l1, F, F)
    w2, b2 = _init_linear_params(k_l2, F, F)

    out = model_forward(x, w1, b1, w2, b2)
    out = jax.block_until_ready(out)

    # Pure-JAX two-step reference (same semantics as the PyTorch forward).
    ref = (x @ w1.T + b1) @ w2.T + b2
    assert out.shape == (B, F)
    assert jnp.allclose(out, ref, atol=1e-5, rtol=1e-5), (
        float(jnp.max(jnp.abs(out - ref)))
    )

    print("KERNEL_OK")
</pallas_src>

<mosaic_0001>
module attributes {stable_mosaic.version = 11 : i64} {
  func.func @_fused_linear_kernel(%arg0: i32, %arg1: memref<16x16xf32, #tpu.memory_space<vmem>>, %arg2: memref<16x1xf32, #tpu.memory_space<vmem>>, %arg3: memref<16x128xf32, #tpu.memory_space<vmem>>, %arg4: memref<16x128xf32, #tpu.memory_space<vmem>>) attributes {dimension_semantics = [#tpu.dimension_semantics<parallel>], iteration_bounds = array<i64: 1>, scalar_prefetch = 0 : i64, scratch_operands = 0 : i64, tpu.core_type = #tpu.core_type<tc>, window_params = [{pipeline_mode = #tpu.pipeline_mode<synchronous>, transform_indices = @transform_0, window_bounds = array<i64: 16, 16>}, {pipeline_mode = #tpu.pipeline_mode<synchronous>, transform_indices = @transform_1, window_bounds = array<i64: 16, 1>}, {transform_indices = @transform_2, window_bounds = array<i64: 16, 128>}, {transform_indices = @transform_3, window_bounds = array<i64: 16, 128>}]} {
    %c0 = arith.constant 0 : index
    %c0_0 = arith.constant 0 : index
    %0 = vector.load %arg1[%c0, %c0_0] : memref<16x16xf32, #tpu.memory_space<vmem>>, vector<16x16xf32>
    %c0_1 = arith.constant 0 : index
    %c0_2 = arith.constant 0 : index
    %1 = vector.load %arg3[%c0_1, %c0_2] : memref<16x128xf32, #tpu.memory_space<vmem>>, vector<16x128xf32>
    %cst = arith.constant dense<0.000000e+00> : vector<16x128xf32>
    %2 = tpu.matmul %0, %1, %cst {dimension_numbers = #tpu.dot_dimension_numbers<[1], [0], [0], [1], [0, 0, 1, 1], [], []>} : vector<16x16xf32>, vector<16x128xf32>, vector<16x128xf32> -> vector<16x128xf32>
    %c0_3 = arith.constant 0 : index
    %c0_4 = arith.constant 0 : index
    %3 = vector.load %arg2[%c0_3, %c0_4] : memref<16x1xf32, #tpu.memory_space<vmem>>, vector<16x1xf32>
    %4 = vector.broadcast %3 : vector<16x1xf32> to vector<16x128xf32>
    %5 = arith.addf %2, %4 : vector<16x128xf32>
    %c0_5 = arith.constant 0 : index
    %c0_6 = arith.constant 0 : index
    %6 = vector.load %arg4[%c0_5, %c0_6] : memref<16x128xf32, #tpu.memory_space<vmem>>, vector<16x128xf32>
    tpu.vector_store %arg4[%c0_5, %c0_6], %5 {strides = array<i32>} : memref<16x128xf32, #tpu.memory_space<vmem>>, vector<16x128xf32>,
    return
  }
  func.func @transform_0(%arg0: i32) -> (i32, i32) {
    %c0_i32 = arith.constant 0 : i32
    %c0_i32_0 = arith.constant 0 : i32
    %c0_i32_1 = arith.constant 0 : i32
    return %c0_i32, %c0_i32_0 : i32, i32
  }
  func.func @transform_1(%arg0: i32) -> (i32, i32) {
    %c0_i32 = arith.constant 0 : i32
    %c0_i32_0 = arith.constant 0 : i32
    %c0_i32_1 = arith.constant 0 : i32
    return %c0_i32, %c0_i32_0 : i32, i32
  }
  func.func @transform_2(%arg0: i32) -> (i32, i32) {
    %c0_i32 = arith.constant 0 : i32
    %c0_i32_0 = arith.constant 0 : i32
    return %c0_i32, %arg0 : i32, i32
  }
  func.func @transform_3(%arg0: i32) -> (i32, i32) {
    %c0_i32 = arith.constant 0 : i32
    %c0_i32_0 = arith.constant 0 : i32
    return %c0_i32, %arg0 : i32, i32
  }
}

</mosaic_0001>

<llo_original>
// kernel: model_forward_fused.1
$region0: #{model_forward_fused.1}
  #allocation0 [shape = 'u32[]', space=smem, size = 0x4, offset = 0x4, fixed_abs, tag = 'smem constant byte address 0x4 - core index']
  #allocation1 [shape = 'u32[144,128]{1,0:T(1,128)}', space=vmem, size = 0x12000, scoped, tag = 'internal scratch']
  %s0 = inlined_call_operand.vmem [shape: f32[16,16], index: 0, kind: input, shape index: {}]
  %s1 = inlined_call_operand.vmem [shape: f32[16,1], index: 1, kind: input, shape index: {}]
  %s2 = inlined_call_operand.vmem [shape: f32[16,128], index: 2, kind: input, shape index: {}]
  %s3 = inlined_call_operand.vmem [shape: f32[16,128], index: 3, kind: output, shape index: {}]
  %s4 = sld [smem:[#allocation0]]
  $region22: #{model_forward_fused.1} parent=0
    _
  %s6 = ssub.s32 1, %s4
  %s7 = scalar_select 0, %s6, %s4
  // Predicated region
  $region2: #{model_forward_fused.1} parent=0 // pred_check
    _
  $region3: #{model_forward_fused.1} parent=0 // pred_check_branch
    %9 = sbr.rel (0) target = $region5
  $region4: #{model_forward_fused.1} parent=0 // pred_region
    _
  $region5: #{model_forward_fused.1} parent=0 // pred_fallthru
    _
  // Predicated region
  $region6: #{model_forward_fused.1} parent=0 // pred_check
    _
  $region7: #{model_forward_fused.1} parent=0 // pred_check_branch
    %11 = sbr.rel (0) target = $region9
  $region8: #{model_forward_fused.1} parent=0 // pred_region
    _
  $region9: #{model_forward_fused.1} parent=0 // pred_fallthru
    _
  // Predicated region
  $region10: #{model_forward_fused.1} parent=0 // pred_check
    _
  $region11: #{model_forward_fused.1} parent=0 // pred_check_branch
    %13 = sbr.rel (0) target = $region13
  $region12: #{model_forward_fused.1} parent=0 // pred_region
    _
  $region13: #{model_forward_fused.1} parent=0 // pred_fallthru
    _
  %v14 = vld [vmem:[%s0] sm:$0xff]
  %v15 = vld [vmem:[%s0 + $0x8] sm:$0xff]
  %v16 = vld [vmem:[%s2] sm:$0xff]
  %v17 = vld [vmem:[%s2 + $0x8] sm:$0xff]
  %v18 = vld [vmem:[%s1] sm:$0xff]
  %v19 = vld [vmem:[%s1 + $0x8] sm:$0xff]
  %21 = vset.pattern.permute.xlu0 0
  %22 = vperm.xlu0 %21, %v18
  %v23 = vpop.permute.xlu0 %22
  %26 = vset.pattern.permute.xlu0 0
  %27 = vperm.xlu0 %26, %v19
  %v28 = vpop.permute.xlu0 %27
  %vm30 = vcmask 130048
  %v32 = vsel %vm30, %v14, 0
  %v35 = vsel %vm30, %v15, 0
  %37 = vmatprep.subr.mxu0 0.0
  %38 = vmatpush1.msra.mxu0 0.0
  %39 = vmatprep.subr.mxu0 0.0
  %40 = vmatpush1.msra.mxu0 0.0
  %41 = vmatprep.subr.mxu0 0.0
  %42 = vmatpush1.msra.mxu0 0.0
  %43 = vmatprep.subr.mxu0 0.0
  %44 = vmatpush1.msra.mxu0 0.0
  %45 = vmatprep.subr.mxu0 0.0
  %46 = vmatpush1.msra.mxu0 0.0
  %47 = vmatprep.subr.mxu0 0.0
  %48 = vmatpush1.msra.mxu0 0.0
  %49 = vmatprep.subr.mxu0 0.0
  %50 = vmatpush1.msra.mxu0 0.0
  %51 = vmatprep.subr.mxu0 0.0
  %52 = vmatpush1.msra.mxu0 0.0
  %53 = vmatprep.subr.mxu0 0.0
  %54 = vmatpush1.msra.mxu0 0.0
  %55 = vmatprep.subr.mxu0 0.0
  %56 = vmatpush1.msra.mxu0 0.0
  %57 = vmatprep.subr.mxu0 0.0
  %58 = vmatpush1.msra.mxu0 0.0
  %59 = vmatprep.subr.mxu0 0.0
  %60 = vmatpush1.msra.mxu0 0.0
  %61 = vmatprep.subr.mxu0 0.0
  %62 = vmatpush1.msra.mxu0 0.0
  %63 = vmatprep.subr.mxu0 0.0
  %64 = vmatpush1.msra.mxu0 0.0
  %65 = vmatprep.subr.mxu0 0.0
  %66 = vmatpush1.msra.mxu0 %v17
  %67 = vmatprep.subr.mxu0 0.0
  %68 = vmatpush1.msra.mxu0 %v16
  %69 = vmatprep.subr.mxu0 0.0
  %70 = vmatpush2.msra.mxu0 0.0
  %71 = vmatprep.subr.mxu0 0.0
  %72 = vmatpush2.msra.mxu0 0.0
  %73 = vmatprep.subr.mxu0 0.0
  %74 = vmatpush2.msra.mxu0 0.0
  %75 = vmatprep.subr.mxu0 0.0
  %76 = vmatpush2.msra.mxu0 0.0
  %77 = vmatprep.subr.mxu0 0.0
  %78 = vmatpush2.msra.mxu0 0.0
  %79 = vmatprep.subr.mxu0 0.0
  %80 = vmatpush2.msra.mxu0 0.0
  %81 = vmatprep.subr.mxu0 0.0
  %82 = vmatpush2.msra.mxu0 0.0
  %83 = vmatprep.subr.mxu0 0.0
  %84 = vmatpush2.msra.mxu0 0.0
  %85 = vmatprep.subr.mxu0 0.0
  %86 = vmatpush2.msra.mxu0 0.0
  %87 = vmatprep.subr.mxu0 0.0
  %88 = vmatpush2.msra.mxu0 0.0
  %89 = vmatprep.subr.mxu0 0.0
  %90 = vmatpush2.msra.mxu0 0.0
  %91 = vmatprep.subr.mxu0 0.0
  %92 = vmatpush2.msra.mxu0 0.0
  %93 = vmatprep.subr.mxu0 0.0
  %94 = vmatpush2.msra.mxu0 0.0
  %95 = vmatprep.subr.mxu0 0.0
  %96 = vmatpush2.msra.mxu0 0.0
  %97 = vmatprep.subr.mxu0 0.0
  %98 = vmatpush2.msra.mxu0 0.0
  %99 = vmatprep.subr.mxu0 0.0
  %100 = vmatpush2.msra.mxu0 0.0
  %101 = vmatprep.mubr.f32.mxu0 0.0
  %102 = vmatmul.mubr.f32.gmra.mxu0 %v32
  %v103 = vpop.f32.mrf.mxu0
  %v104 = vadd.f32 %v23, %v103
  %v105 = vpop.f32.mrf.mxu0
  %106 = vmatprep.mubr.f32.mxu0 0.0
  %107 = vmatmul.mubr.f32.gmra.mxu0 %v35
  %v108 = vpop.f32.mrf.mxu0
  %v109 = vadd.f32 %v28, %v108
  %v110 = vpop.f32.mrf.mxu0
  %111 = vdwg.mxu0
  %112 = vst [vmem:[%s3] sm:$0xff] %v104
  %113 = vst [vmem:[%s3 + $0x8] sm:$0xff] %v109
  // Predicated region
  $region14: #{model_forward_fused.1} parent=0 // pred_check
    _
  $region15: #{model_forward_fused.1} parent=0 // pred_check_branch
    %115 = sbr.rel (0) target = $region17
  $region16: #{model_forward_fused.1} parent=0 // pred_region
    _
  $region17: #{model_forward_fused.1} parent=0 // pred_fallthru
    _
  // Predicated region
  $region18: #{model_forward_fused.1} parent=0 // pred_check
    _
  $region19: #{model_forward_fused.1} parent=0 // pred_check_branch
    %117 = sbr.rel (0) target = $region21
  $region20: #{model_forward_fused.1} parent=0 // pred_region
    _
  $region21: #{model_forward_fused.1} parent=0 // pred_fallthru
    _

</llo_original>
